<compile_context>
chip_gen: v6e
topology: v6e:2x2x1
jax: 0.10.0
libtpu: 0.0.40
codegen_flags: <defaults>
</compile_context>

<pallas_src>
import jax
import jax.numpy as jnp
from jax.experimental import pallas as pl
from jax.experimental.pallas import tpu as pltpu


_LANE = 128
_SUBLANE = 8
_NEG_BIG = -1e30  # bias for padded output columns -> exp() underflows to exactly 0


def _round_up(n, m):
    return ((n + m - 1) // m) * m


def _policy_mlp_kernel(x_ref, w1_ref, b1_ref, w2_ref, b2_ref, out_ref):
    # fc1 + ReLU (f32 accumulation on the MXU; element-wise stays f32 for v5e's VPU)
    h = jnp.dot(x_ref[...], w1_ref[...], preferred_element_type=jnp.float32)
    h = jnp.maximum(h + b1_ref[...], 0.0)                 # (TB, H) + (1, H) broadcast
    # fc2 -> logits over the padded, lane-dense (128-wide) output columns
    logits = jnp.dot(h, w2_ref[...], preferred_element_type=jnp.float32)
    logits = logits + b2_ref[...]                         # (TB, Op) + (1, Op) broadcast
    # numerically stable softmax over dim=-1; padded columns carry a -1e30 bias so
    # exp(logit - m) == 0 there and the softmax over the real columns is unchanged.
    m = jnp.max(logits, axis=-1, keepdims=True)
    e = jnp.exp(logits - m)
    denom = jnp.sum(e, axis=-1, keepdims=True)
    # approx reciprocal lowers to the otherwise-idle EUP slot (essentially free).
    out_ref[...] = (e * pl.reciprocal(denom, approx=True)).astype(out_ref.dtype)


def policy_net_forward(x, w1, b1, w2, b2, *, block_rows=512):
    """x: (B, In) f32; w1: (In, H); b1: (H,); w2: (H, O); b2: (O,). Returns (B, O) probs."""
    B, In = x.shape
    H = w1.shape[1]
    O = w2.shape[1]

    # Lane-dense output width (multiple of 128 lanes).
    O_pad = _round_up(O, _LANE)
    # Batch tile: largest tile up to `block_rows`, 8-sublane aligned.
    tb = min(_round_up(block_rows, _SUBLANE), _round_up(B, _SUBLANE))
    B_pad = _round_up(B, tb)

    x_p = x if B_pad == B else jnp.pad(x, ((0, B_pad - B), (0, 0)))
    # Zero weight columns + very negative bias for padded output columns.
    w2_p = jnp.pad(w2, ((0, 0), (0, O_pad - O)))
    b2_p = jnp.pad(b2, ((0, O_pad - O),), constant_values=_NEG_BIG).reshape(1, O_pad)
    b1_2d = b1.reshape(1, H)

    vmem = pltpu.MemorySpace.VMEM
    grid = (B_pad // tb,)

    out = pl.pallas_call(
        _policy_mlp_kernel,
        out_shape=jax.ShapeDtypeStruct((B_pad, O_pad), jnp.float32),
        grid_spec=pltpu.PrefetchScalarGridSpec(
            num_scalar_prefetch=0,
            grid=grid,
            in_specs=[
                # x tile marches over the batch grid (pipelined / double-buffered)...
                pl.BlockSpec((tb, In), lambda i: (i, 0), memory_space=vmem),
                # ...weights & biases use a constant index_map -> DMA'd once,
                # VMEM-resident across all grid steps.
                pl.BlockSpec((In, H), lambda i: (0, 0), memory_space=vmem),
                pl.BlockSpec((1, H), lambda i: (0, 0), memory_space=vmem),
                pl.BlockSpec((H, O_pad), lambda i: (0, 0), memory_space=vmem),
                pl.BlockSpec((1, O_pad), lambda i: (0, 0), memory_space=vmem),
            ],
            out_specs=pl.BlockSpec((tb, O_pad), lambda i: (i, 0), memory_space=vmem),
        ),
        compiler_params=pltpu.CompilerParams(
            # Batch axis is embarrassingly parallel: shards across both TensorCores
            # on v7x; no-op on single-TC v5e/v6e.
            dimension_semantics=("parallel",),
        ),
    )(x_p, w1, b1_2d, w2_p, b2_p)

    return out[:B, :O]


def init_params(key, input_size, hidden_size, output_size):
    """Deterministic init mimicking nn.Linear's U(-1/sqrt(fan_in), 1/sqrt(fan_in))."""
    k1, k2, k3, k4 = jax.random.split(key, 4)
    bound1 = 1.0 / (input_size ** 0.5)
    bound2 = 1.0 / (hidden_size ** 0.5)
    # stored directly in (in, out) layout (i.e. PyTorch weight transposed)
    w1 = jax.random.uniform(k1, (input_size, hidden_size), jnp.float32, -bound1, bound1)
    b1 = jax.random.uniform(k2, (hidden_size,), jnp.float32, -bound1, bound1)
    w2 = jax.random.uniform(k3, (hidden_size, output_size), jnp.float32, -bound2, bound2)
    b2 = jax.random.uniform(k4, (output_size,), jnp.float32, -bound2, bound2)
    return w1, b1, w2, b2


def _reference(x, w1, b1, w2, b2):
    h = jnp.maximum(x @ w1 + b1, 0.0)
    return jax.nn.softmax(h @ w2 + b2, axis=-1)


if __name__ == "__main__":
    # Small shapes consistent with a REINFORCE policy net (e.g. CartPole):
    # input_size=4 observation dims, hidden_size=32, output_size=2 actions.
    input_size, hidden_size, output_size = 4, 32, 2

    key = jax.random.PRNGKey(0)
    kx, kp, kx2 = jax.random.split(key, 3)
    w1, b1, w2, b2 = init_params(kp, input_size, hidden_size, output_size)
    fwd = jax.jit(policy_net_forward)

    # --- small batch (single tile, single grid step) ---
    batch = 8
    x = jax.random.normal(kx, (batch, input_size), dtype=jnp.float32)
    probs = jax.block_until_ready(fwd(x, w1, b1, w2, b2))
    ref = _reference(x, w1, b1, w2, b2)
    assert probs.shape == (batch, output_size)
    # approx=True reciprocal -> ~1e-3-level differences vs exact softmax
    assert jnp.allclose(probs, ref, atol=2e-3, rtol=2e-3)
    assert jnp.allclose(jnp.sum(probs, axis=-1), 1.0, atol=5e-3)

    # --- larger batch exercising the batch grid + row/column padding paths ---
    batch2 = 1000  # -> padded to 1024 rows, grid of 2 tiles of 512
    x2 = jax.random.normal(kx2, (batch2, input_size), dtype=jnp.float32)
    probs2 = jax.block_until_ready(fwd(x2, w1, b1, w2, b2))
    ref2 = _reference(x2, w1, b1, w2, b2)
    assert probs2.shape == (batch2, output_size)
    assert jnp.allclose(probs2, ref2, atol=2e-3, rtol=2e-3)
    assert jnp.allclose(jnp.sum(probs2, axis=-1), 1.0, atol=5e-3)

    print("KERNEL_OK")
</pallas_src>

<mosaic_0001>
module attributes {stable_mosaic.version = 11 : i64} {
  func.func @_policy_mlp_kernel(%arg0: i32, %arg1: memref<8x4xf32, #tpu.memory_space<vmem>>, %arg2: memref<4x32xf32, #tpu.memory_space<vmem>>, %arg3: memref<1x32xf32, #tpu.memory_space<vmem>>, %arg4: memref<32x128xf32, #tpu.memory_space<vmem>>, %arg5: memref<1x128xf32, #tpu.memory_space<vmem>>, %arg6: memref<8x128xf32, #tpu.memory_space<vmem>>) attributes {dimension_semantics = [#tpu.dimension_semantics<parallel>], iteration_bounds = array<i64: 1>, scalar_prefetch = 0 : i64, scratch_operands = 0 : i64, tpu.core_type = #tpu.core_type<tc>, window_params = [{transform_indices = @transform_0, window_bounds = array<i64: 8, 4>}, {pipeline_mode = #tpu.pipeline_mode<synchronous>, transform_indices = @transform_1, window_bounds = array<i64: 4, 32>}, {pipeline_mode = #tpu.pipeline_mode<synchronous>, transform_indices = @transform_2, window_bounds = array<i64: 1, 32>}, {pipeline_mode = #tpu.pipeline_mode<synchronous>, transform_indices = @transform_3, window_bounds = array<i64: 32, 128>}, {pipeline_mode = #tpu.pipeline_mode<synchronous>, transform_indices = @transform_4, window_bounds = array<i64: 1, 128>}, {transform_indices = @transform_5, window_bounds = array<i64: 8, 128>}]} {
    %c0 = arith.constant 0 : index
    %c0_0 = arith.constant 0 : index
    %0 = vector.load %arg1[%c0, %c0_0] : memref<8x4xf32, #tpu.memory_space<vmem>>, vector<8x4xf32>
    %c0_1 = arith.constant 0 : index
    %c0_2 = arith.constant 0 : index
    %1 = vector.load %arg2[%c0_1, %c0_2] : memref<4x32xf32, #tpu.memory_space<vmem>>, vector<4x32xf32>
    %cst = arith.constant dense<0.000000e+00> : vector<8x32xf32>
    %2 = tpu.matmul %0, %1, %cst {dimension_numbers = #tpu.dot_dimension_numbers<[1], [0], [0], [1], [0, 0, 1, 1], [], []>} : vector<8x4xf32>, vector<4x32xf32>, vector<8x32xf32> -> vector<8x32xf32>
    %c0_3 = arith.constant 0 : index
    %c0_4 = arith.constant 0 : index
    %3 = vector.load %arg3[%c0_3, %c0_4] : memref<1x32xf32, #tpu.memory_space<vmem>>, vector<1x32xf32>
    %4 = vector.broadcast %3 : vector<1x32xf32> to vector<8x32xf32>
    %5 = arith.addf %2, %4 : vector<8x32xf32>
    %cst_5 = arith.constant 0.000000e+00 : f32
    %6 = vector.broadcast %cst_5 : f32 to vector<8x32xf32>
    %7 = arith.maximumf %5, %6 : vector<8x32xf32>
    %c0_6 = arith.constant 0 : index
    %c0_7 = arith.constant 0 : index
    %8 = vector.load %arg4[%c0_6, %c0_7] : memref<32x128xf32, #tpu.memory_space<vmem>>, vector<32x128xf32>
    %cst_8 = arith.constant dense<0.000000e+00> : vector<8x128xf32>
    %9 = tpu.matmul %7, %8, %cst_8 {dimension_numbers = #tpu.dot_dimension_numbers<[1], [0], [0], [1], [0, 0, 1, 1], [], []>} : vector<8x32xf32>, vector<32x128xf32>, vector<8x128xf32> -> vector<8x128xf32>
    %c0_9 = arith.constant 0 : index
    %c0_10 = arith.constant 0 : index
    %10 = vector.load %arg5[%c0_9, %c0_10] : memref<1x128xf32, #tpu.memory_space<vmem>>, vector<1x128xf32>
    %11 = vector.broadcast %10 : vector<1x128xf32> to vector<8x128xf32>
    %12 = arith.addf %9, %11 : vector<8x128xf32>
    %cst_11 = arith.constant dense<0xFF800000> : vector<8xf32>
    %13 = vector.multi_reduction <maximumf>, %12, %cst_11 [1] : vector<8x128xf32> to vector<8xf32>
    %14 = vector.shape_cast %13 : vector<8xf32> to vector<8x1xf32>
    %15 = vector.broadcast %14 : vector<8x1xf32> to vector<8x128xf32>
    %16 = arith.subf %12, %15 : vector<8x128xf32>
    %17 = math.exp %16 : vector<8x128xf32>
    %cst_12 = arith.constant dense<0.000000e+00> : vector<8xf32>
    %18 = vector.multi_reduction <add>, %17, %cst_12 [1] : vector<8x128xf32> to vector<8xf32>
    %19 = vector.shape_cast %18 : vector<8xf32> to vector<8x1xf32>
    %20 = tpu.reciprocal %19 {approx = true} : vector<8x1xf32> -> vector<8x1xf32>
    %21 = vector.broadcast %20 : vector<8x1xf32> to vector<8x128xf32>
    %22 = arith.mulf %17, %21 : vector<8x128xf32>
    %c0_13 = arith.constant 0 : index
    %c0_14 = arith.constant 0 : index
    %23 = vector.load %arg6[%c0_13, %c0_14] : memref<8x128xf32, #tpu.memory_space<vmem>>, vector<8x128xf32>
    tpu.vector_store %arg6[%c0_13, %c0_14], %22 {strides = array<i32>} : memref<8x128xf32, #tpu.memory_space<vmem>>, vector<8x128xf32>,
    return
  }
  func.func @transform_0(%arg0: i32) -> (i32, i32) {
    %c0_i32 = arith.constant 0 : i32
    %c0_i32_0 = arith.constant 0 : i32
    return %arg0, %c0_i32 : i32, i32
  }
  func.func @transform_1(%arg0: i32) -> (i32, i32) {
    %c0_i32 = arith.constant 0 : i32
    %c0_i32_0 = arith.constant 0 : i32
    %c0_i32_1 = arith.constant 0 : i32
    return %c0_i32, %c0_i32_0 : i32, i32
  }
  func.func @transform_2(%arg0: i32) -> (i32, i32) {
    %c0_i32 = arith.constant 0 : i32
    %c0_i32_0 = arith.constant 0 : i32
    %c0_i32_1 = arith.constant 0 : i32
    return %c0_i32, %c0_i32_0 : i32, i32
  }
  func.func @transform_3(%arg0: i32) -> (i32, i32) {
    %c0_i32 = arith.constant 0 : i32
    %c0_i32_0 = arith.constant 0 : i32
    %c0_i32_1 = arith.constant 0 : i32
    return %c0_i32, %c0_i32_0 : i32, i32
  }
  func.func @transform_4(%arg0: i32) -> (i32, i32) {
    %c0_i32 = arith.constant 0 : i32
    %c0_i32_0 = arith.constant 0 : i32
    %c0_i32_1 = arith.constant 0 : i32
    return %c0_i32, %c0_i32_0 : i32, i32
  }
  func.func @transform_5(%arg0: i32) -> (i32, i32) {
    %c0_i32 = arith.constant 0 : i32
    %c0_i32_0 = arith.constant 0 : i32
    return %arg0, %c0_i32 : i32, i32
  }
}

</mosaic_0001>

<llo_original>
// kernel: policy_net_forward.1
$region0: #{policy_net_forward.1}
  #allocation0 [shape = 'u32[]', space=smem, size = 0x4, offset = 0x4, fixed_abs, tag = 'smem constant byte address 0x4 - core index']
  #allocation1 [shape = 'u32[144,128]{1,0:T(1,128)}', space=vmem, size = 0x12000, scoped, tag = 'internal scratch']
  %s0 = inlined_call_operand.vmem [shape: f32[8,4], index: 0, kind: input, shape index: {}]
  %s1 = inlined_call_operand.vmem [shape: f32[4,32], index: 1, kind: input, shape index: {}]
  %s2 = inlined_call_operand.vmem [shape: f32[1,32], index: 2, kind: input, shape index: {}]
  %s3 = inlined_call_operand.vmem [shape: f32[32,128], index: 3, kind: input, shape index: {}]
  %s4 = inlined_call_operand.vmem [shape: f32[1,128], index: 4, kind: input, shape index: {}]
  %s5 = inlined_call_operand.vmem [shape: f32[8,128], index: 5, kind: output, shape index: {}]
  %s6 = sld [smem:[#allocation0]]
  $region30: #{policy_net_forward.1} parent=0
    _
  %s8 = ssub.s32 1, %s6
  %s9 = scalar_select 0, %s8, %s6
  // Predicated region
  $region2: #{policy_net_forward.1} parent=0 // pred_check
    _
  $region3: #{policy_net_forward.1} parent=0 // pred_check_branch
    %11 = sbr.rel (0) target = $region5
  $region4: #{policy_net_forward.1} parent=0 // pred_region
    _
  $region5: #{policy_net_forward.1} parent=0 // pred_fallthru
    _
  // Predicated region
  $region6: #{policy_net_forward.1} parent=0 // pred_check
    _
  $region7: #{policy_net_forward.1} parent=0 // pred_check_branch
    %13 = sbr.rel (0) target = $region9
  $region8: #{policy_net_forward.1} parent=0 // pred_region
    _
  $region9: #{policy_net_forward.1} parent=0 // pred_fallthru
    _
  // Predicated region
  $region10: #{policy_net_forward.1} parent=0 // pred_check
    _
  $region11: #{policy_net_forward.1} parent=0 // pred_check_branch
    %15 = sbr.rel (0) target = $region13
  $region12: #{policy_net_forward.1} parent=0 // pred_region
    _
  $region13: #{policy_net_forward.1} parent=0 // pred_fallthru
    _
  // Predicated region
  $region14: #{policy_net_forward.1} parent=0 // pred_check
    _
  $region15: #{policy_net_forward.1} parent=0 // pred_check_branch
    %17 = sbr.rel (0) target = $region17
  $region16: #{policy_net_forward.1} parent=0 // pred_region
    _
  $region17: #{policy_net_forward.1} parent=0 // pred_fallthru
    _
  // Predicated region
  $region18: #{policy_net_forward.1} parent=0 // pred_check
    _
  $region19: #{policy_net_forward.1} parent=0 // pred_check_branch
    %19 = sbr.rel (0) target = $region21
  $region20: #{policy_net_forward.1} parent=0 // pred_region
    _
  $region21: #{policy_net_forward.1} parent=0 // pred_fallthru
    _
  %v20 = vld [vmem:[%s0] sm:$0xff]
  %v21 = vld [vmem:[%s1] sm:$0xf]
  %v22 = vld [vmem:[%s2] sm:$0x1]
  %v24 = vlaneseq
  %v25 = vshrl.u32 %v24, 7
  %v26 = vsub.s32 0, %v25
  %v27 = vrot.slane %v22, %v26
  %vm29 = vcmask 31744
  %v31 = vsel %vm29, %v20, 0
  %vm33 = vcmask 1043456
  %v35 = vsel %vm33, %v21, 0
  %37 = vmatprep.subr.mxu0 0.0
  %38 = vmatpush1.msra.mxu0 0.0
  %39 = vmatprep.subr.mxu0 0.0
  %40 = vmatpush1.msra.mxu0 0.0
  %41 = vmatprep.subr.mxu0 0.0
  %42 = vmatpush1.msra.mxu0 0.0
  %43 = vmatprep.subr.mxu0 0.0
  %44 = vmatpush1.msra.mxu0 0.0
  %45 = vmatprep.subr.mxu0 0.0
  %46 = vmatpush1.msra.mxu0 0.0
  %47 = vmatprep.subr.mxu0 0.0
  %48 = vmatpush1.msra.mxu0 0.0
  %49 = vmatprep.subr.mxu0 0.0
  %50 = vmatpush1.msra.mxu0 0.0
  %51 = vmatprep.subr.mxu0 0.0
  %52 = vmatpush1.msra.mxu0 0.0
  %53 = vmatprep.subr.mxu0 0.0
  %54 = vmatpush1.msra.mxu0 0.0
  %55 = vmatprep.subr.mxu0 0.0
  %56 = vmatpush1.msra.mxu0 0.0
  %57 = vmatprep.subr.mxu0 0.0
  %58 = vmatpush1.msra.mxu0 0.0
  %59 = vmatprep.subr.mxu0 0.0
  %60 = vmatpush1.msra.mxu0 0.0
  %61 = vmatprep.subr.mxu0 0.0
  %62 = vmatpush1.msra.mxu0 0.0
  %63 = vmatprep.subr.mxu0 0.0
  %64 = vmatpush1.msra.mxu0 0.0
  %65 = vmatprep.subr.mxu0 0.0
  %66 = vmatpush1.msra.mxu0 0.0
  %67 = vmatprep.subr.mxu0 0.0
  %68 = vmatpush1.msra.mxu0 %v35
  %69 = vmatprep.subr.mxu0 0.0
  %70 = vmatpush2.msra.mxu0 0.0
  %71 = vmatprep.subr.mxu0 0.0
  %72 = vmatpush2.msra.mxu0 0.0
  %73 = vmatprep.subr.mxu0 0.0
  %74 = vmatpush2.msra.mxu0 0.0
  %75 = vmatprep.subr.mxu0 0.0
  %76 = vmatpush2.msra.mxu0 0.0
  %77 = vmatprep.subr.mxu0 0.0
  %78 = vmatpush2.msra.mxu0 0.0
  %79 = vmatprep.subr.mxu0 0.0
  %80 = vmatpush2.msra.mxu0 0.0
  %81 = vmatprep.subr.mxu0 0.0
  %82 = vmatpush2.msra.mxu0 0.0
  %83 = vmatprep.subr.mxu0 0.0
  %84 = vmatpush2.msra.mxu0 0.0
  %85 = vmatprep.subr.mxu0 0.0
  %86 = vmatpush2.msra.mxu0 0.0
  %87 = vmatprep.subr.mxu0 0.0
  %88 = vmatpush2.msra.mxu0 0.0
  %89 = vmatprep.subr.mxu0 0.0
  %90 = vmatpush2.msra.mxu0 0.0
  %91 = vmatprep.subr.mxu0 0.0
  %92 = vmatpush2.msra.mxu0 0.0
  %93 = vmatprep.subr.mxu0 0.0
  %94 = vmatpush2.msra.mxu0 0.0
  %95 = vmatprep.subr.mxu0 0.0
  %96 = vmatpush2.msra.mxu0 0.0
  %97 = vmatprep.subr.mxu0 0.0
  %98 = vmatpush2.msra.mxu0 0.0
  %99 = vmatprep.subr.mxu0 0.0
  %100 = vmatpush2.msra.mxu0 0.0
  %101 = vmatprep.mubr.f32.mxu0 0.0
  %102 = vmatmul.mubr.f32.gmra.mxu0 %v31
  %v103 = vpop.f32.mrf.mxu0
  %v104 = vadd.f32 %v27, %v103
  %v105 = vpop.f32.mrf.mxu0
  %106 = vdwg.mxu0
  %v107 = vmax.f32 %v104, 0.0
  %v108 = vld [vmem:[%s3] sm:$0xff]
  %v109 = vld [vmem:[%s3 + $0x8] sm:$0xff]
  %v110 = vld [vmem:[%s3 + $0x10] sm:$0xff]
  %v111 = vld [vmem:[%s3 + $0x18] sm:$0xff]
  %v112 = vld [vmem:[%s4] sm:$0x1]
  %v114 = vlaneseq
  %v115 = vshrl.u32 %v114, 7
  %v116 = vsub.s32 0, %v115
  %v117 = vrot.slane %v112, %v116
  %vm119 = vcmask 261120
  %v121 = vsel %vm119, %v107, 0
  %123 = vmatprep.subr.mxu0 0.0
  %124 = vmatpush1.msra.mxu0 0.0
  %125 = vmatprep.subr.mxu0 0.0
  %126 = vmatpush1.msra.mxu0 0.0
  %127 = vmatprep.subr.mxu0 0.0
  %128 = vmatpush1.msra.mxu0 0.0
  %129 = vmatprep.subr.mxu0 0.0
  %130 = vmatpush1.msra.mxu0 0.0
  %131 = vmatprep.subr.mxu0 0.0
  %132 = vmatpush1.msra.mxu0 0.0
  %133 = vmatprep.subr.mxu0 0.0
  %134 = vmatpush1.msra.mxu0 0.0
  %135 = vmatprep.subr.mxu0 0.0
  %136 = vmatpush1.msra.mxu0 0.0
  %137 = vmatprep.subr.mxu0 0.0
  %138 = vmatpush1.msra.mxu0 0.0
  %139 = vmatprep.subr.mxu0 0.0
  %140 = vmatpush1.msra.mxu0 0.0
  %141 = vmatprep.subr.mxu0 0.0
  %142 = vmatpush1.msra.mxu0 0.0
  %143 = vmatprep.subr.mxu0 0.0
  %144 = vmatpush1.msra.mxu0 0.0
  %145 = vmatprep.subr.mxu0 0.0
  %146 = vmatpush1.msra.mxu0 0.0
  %147 = vmatprep.subr.mxu0 0.0
  %148 = vmatpush1.msra.mxu0 %v111
  %149 = vmatprep.subr.mxu0 0.0
  %150 = vmatpush1.msra.mxu0 %v110
  %151 = vmatprep.subr.mxu0 0.0
  %152 = vmatpush1.msra.mxu0 %v109
  %153 = vmatprep.subr.mxu0 0.0
  %154 = vmatpush1.msra.mxu0 %v108
  %155 = vmatprep.subr.mxu0 0.0
  %156 = vmatpush2.msra.mxu0 0.0
  %157 = vmatprep.subr.mxu0 0.0
  %158 = vmatpush2.msra.mxu0 0.0
  %159 = vmatprep.subr.mxu0 0.0
  %160 = vmatpush2.msra.mxu0 0.0
  %161 = vmatprep.subr.mxu0 0.0
  %162 = vmatpush2.msra.mxu0 0.0
  %163 = vmatprep.subr.mxu0 0.0
  %164 = vmatpush2.msra.mxu0 0.0
  %165 = vmatprep.subr.mxu0 0.0
  %166 = vmatpush2.msra.mxu0 0.0
  %167 = vmatprep.subr.mxu0 0.0
  %168 = vmatpush2.msra.mxu0 0.0
  %169 = vmatprep.subr.mxu0 0.0
  %170 = vmatpush2.msra.mxu0 0.0
  %171 = vmatprep.subr.mxu0 0.0
  %172 = vmatpush2.msra.mxu0 0.0
  %173 = vmatprep.subr.mxu0 0.0
  %174 = vmatpush2.msra.mxu0 0.0
  %175 = vmatprep.subr.mxu0 0.0
  %176 = vmatpush2.msra.mxu0 0.0
  %177 = vmatprep.subr.mxu0 0.0
  %178 = vmatpush2.msra.mxu0 0.0
  %179 = vmatprep.subr.mxu0 0.0
  %180 = vmatpush2.msra.mxu0 0.0
  %181 = vmatprep.subr.mxu0 0.0
  %182 = vmatpush2.msra.mxu0 0.0
  %183 = vmatprep.subr.mxu0 0.0
  %184 = vmatpush2.msra.mxu0 0.0
  %185 = vmatprep.subr.mxu0 0.0
  %186 = vmatpush2.msra.mxu0 0.0
  %187 = vmatprep.mubr.f32.mxu0 0.0
  %188 = vmatmul.mubr.f32.gmra.mxu0 %v121
  %v189 = vpop.f32.mrf.mxu0
  %v190 = vadd.f32 %v117, %v189
  %v191 = vpop.f32.mrf.mxu0
  %192 = vdwg.mxu0
  %193 = vmax.xlane.f32.xlu0 %v190
  %v194 = vpop.xlane.xlu0 %193
  %v195 = vsub.f32 %v190, %v194
  %v196 = vmul.f32 %v195, 1.442695
  %v197 = vpow.pop %v196
  %198 = vadd.xlane.f32.xlu0 %v197
  %v199 = vpop.xlane.xlu0 %198
  %v200 = vrcp.pop %v199
  %v201 = vmul.f32 %v197, %v200
  %202 = vst [vmem:[%s5] sm:$0xff] %v201
  // Predicated region
  $region22: #{policy_net_forward.1} parent=0 // pred_check
    _
  $region23: #{policy_net_forward.1} parent=0 // pred_check_branch
    %204 = sbr.rel (0) target = $region25
  $region24: #{policy_net_forward.1} parent=0 // pred_region
    _
  $region25: #{policy_net_forward.1} parent=0 // pred_fallthru
    _
  // Predicated region
  $region26: #{policy_net_forward.1} parent=0 // pred_check
    _
  $region27: #{policy_net_forward.1} parent=0 // pred_check_branch
    %206 = sbr.rel (0) target = $region29
  $region28: #{policy_net_forward.1} parent=0 // pred_region
    _
  $region29: #{policy_net_forward.1} parent=0 // pred_fallthru
    _

</llo_original>
